<compile_context>
chip_gen: v6e
topology: v6e:2x2x1
jax: 0.10.0
libtpu: 0.0.40
codegen_flags: <defaults>
</compile_context>

<pallas_src>
import functools

import jax
import jax.numpy as jnp
import numpy as np
from jax.experimental import pallas as pl
from jax.experimental.pallas import tpu as pltpu


# ----------------------------------------------------------------------------
# Pallas kernel (single fused launch)
# ----------------------------------------------------------------------------
def _ggtnet_kernel(
    x_ref,                     # [N, input_dim + pos_enc_dim]   ( h ++ p )
    e_ref,                     # [E, num_edge_feat]
    w_np_ref, b_np_ref,        # block-diag combined (Wh@Whp_h , Wp@Wpo) weights
    we_ref, be_ref,            # embedding_e
    whp_p_ref, bhp_ref,        # Whp: p-path weight + (bias folded with bh@Whp_h)
    w1_ref, b1_ref, w2_ref, b2_ref, w3_ref, b3_ref,      # MLPReadout
    scores_ref, hnode_ref, pnode_ref, eemb_ref,
    *, n_nodes, out_dim,
):
    inv_n = jnp.float32(1.0 / n_nodes)

    # --- ONE block-diagonal MXU matmul for both folded node paths ------------
    #   [h | p] @ blockdiag(Wh @ Whp_h, Wp @ Wpo) + [bh @ Whp_h | bp @ Wpo + bpo]
    hp_pre = (
        jnp.dot(x_ref[...], w_np_ref[...], preferred_element_type=jnp.float32)
        + b_np_ref[...]
    )
    h_whp = hp_pre[:, :out_dim]    # == embedding_h(h) @ Whp_h + bh @ Whp_h  (exact fold)
    p_emb = hp_pre[:, out_dim:]    # == p_out(embedding_p(p))                (exact fold)

    # --- graph-wise centering + L2 normalization of p (single graph) ---------
    p_mean = jnp.sum(p_emb, axis=0, keepdims=True) * inv_n
    p_c = p_emb - p_mean
    p_sq = jnp.sum(p_c * p_c, axis=0, keepdims=True)
    # reference has no epsilon; rsqrt goes to the EUP slot instead of a VALU div
    p_n = p_c * jax.lax.rsqrt(p_sq)

    # --- hp = Whp(cat(h, p)); h-path already folded into hp_pre --------------
    hp = (
        h_whp
        + jnp.dot(p_n, whp_p_ref[...], preferred_element_type=jnp.float32)
        + bhp_ref[...]
    )

    # --- mean readout + MLPReadout (2 halving ReLU layers + head) ------------
    hg = jnp.sum(hp, axis=0, keepdims=True) * inv_n
    y = jnp.maximum(
        jnp.dot(hg, w1_ref[...], preferred_element_type=jnp.float32) + b1_ref[...], 0.0)
    y = jnp.maximum(
        jnp.dot(y, w2_ref[...], preferred_element_type=jnp.float32) + b2_ref[...], 0.0)
    scores = jnp.dot(y, w3_ref[...], preferred_element_type=jnp.float32) + b3_ref[...]

    # --- edge embedding, fused into the same launch ---------------------------
    e_emb = (
        jnp.dot(e_ref[...], we_ref[...], preferred_element_type=jnp.float32)
        + be_ref[...]
    )

    scores_ref[...] = scores
    hnode_ref[...] = hp      # g.ndata['h'] after Whp
    pnode_ref[...] = p_n     # g.ndata['p'] after centering + normalization
    eemb_ref[...] = e_emb    # embedding_e(e)  (unused downstream for L=1)


# ----------------------------------------------------------------------------
# Wrapper
# ----------------------------------------------------------------------------
def _full_spec(shape):
    # whole array as a single block (grid = (1,))
    return pl.BlockSpec(shape, lambda i: (0,) * len(shape))


def _ggtnet_forward_impl(h, e, p, params):
    N, input_dim = h.shape
    pos_enc_dim = p.shape[1]
    E = e.shape[0]
    hidden_dim = params["wh"].shape[1]
    out_dim = params["wpo"].shape[1]
    predict_out = params["w3"].shape[1]

    # Host-side (plain XLA) algebraic folding — exact, no nonlinearity between
    # embedding_p -> p_out, nor between embedding_h -> Whp_h (L=1):
    wp_fused = params["wp"] @ params["wpo"]                       # (pos, out)
    bp_fused = params["bp"] @ params["wpo"] + params["bpo"]       # (1, out)
    wh_whp = params["wh"] @ params["whp_h"]                       # (in, out)
    bh_whp = params["bh"] @ params["whp_h"]                       # (1, out)

    # Block-diagonal combined weight -> one MXU pass for both node paths.
    w_top = jnp.concatenate(
        [wh_whp, jnp.zeros((input_dim, out_dim), jnp.float32)], axis=1)
    w_bot = jnp.concatenate(
        [jnp.zeros((pos_enc_dim, out_dim), jnp.float32), wp_fused], axis=1)
    w_np = jnp.concatenate([w_top, w_bot], axis=0)                # (in+pos, 2*out)
    b_np = jnp.concatenate([bh_whp, bp_fused], axis=1)            # (1, 2*out)

    x = jnp.concatenate([h, p], axis=1)                           # (N, in+pos)

    ins = (
        x, e,
        w_np, b_np,
        params["we"], params["be"],
        params["whp_p"], params["bhp"],
        params["w1"], params["b1"],
        params["w2"], params["b2"],
        params["w3"], params["b3"],
    )
    out_shapes = (
        jax.ShapeDtypeStruct((1, predict_out), jnp.float32),  # scores
        jax.ShapeDtypeStruct((N, out_dim), jnp.float32),      # node h (= hp)
        jax.ShapeDtypeStruct((N, out_dim), jnp.float32),      # node p
        jax.ShapeDtypeStruct((E, hidden_dim), jnp.float32),   # edge embedding
    )

    kernel = functools.partial(_ggtnet_kernel, n_nodes=N, out_dim=out_dim)
    return pl.pallas_call(
        kernel,
        out_shape=out_shapes,
        grid=(1,),
        in_specs=[_full_spec(v.shape) for v in ins],
        out_specs=[_full_spec(s.shape) for s in out_shapes],
        compiler_params=pltpu.CompilerParams(dimension_semantics=("arbitrary",)),
    )(*ins)


@jax.jit
def ggtnet_forward(h, e, p, params):
    """Full GGTNet forward (L=1): returns (scores, h_nodes, p_nodes, e_emb)."""
    return _ggtnet_forward_impl(h, e, p, params)


# ----------------------------------------------------------------------------
# Pure-JAX reference (faithful, unfused — matches the PyTorch op ordering)
# ----------------------------------------------------------------------------
def _reference_forward(h, e, p, params):
    h1 = h @ params["wh"] + params["bh"]
    p1 = p @ params["wp"] + params["bp"]
    e1 = e @ params["we"] + params["be"]
    p2 = p1 @ params["wpo"] + params["bpo"]
    p2 = p2 - jnp.mean(p2, axis=0, keepdims=True)
    p2 = p2 / jnp.sqrt(jnp.sum(p2 * p2, axis=0, keepdims=True))
    whp = jnp.concatenate([params["whp_h"], params["whp_p"]], axis=0)
    hp = jnp.concatenate([h1, p2], axis=1) @ whp + params["bhp"]
    hg = jnp.mean(hp, axis=0, keepdims=True)
    y = jnp.maximum(hg @ params["w1"] + params["b1"], 0.0)
    y = jnp.maximum(y @ params["w2"] + params["b2"], 0.0)
    scores = y @ params["w3"] + params["b3"]
    return scores, hp, p2, e1


# ----------------------------------------------------------------------------
# Deterministic parameter init (PyTorch nn.Linear-style uniform init)
# ----------------------------------------------------------------------------
def init_params(key, input_dim, pos_enc_dim, num_edge_feat, hidden_dim, out_dim,
                predict_out):
    keys = jax.random.split(key, 8)

    def lin(k, din, dout):
        kw, kb = jax.random.split(k)
        bound = 1.0 / jnp.sqrt(din)
        w = jax.random.uniform(kw, (din, dout), jnp.float32, -bound, bound)
        b = jax.random.uniform(kb, (1, dout), jnp.float32, -bound, bound)
        return w, b

    params = {}
    params["wh"], params["bh"] = lin(keys[0], input_dim, hidden_dim)
    params["wp"], params["bp"] = lin(keys[1], pos_enc_dim, hidden_dim)
    params["we"], params["be"] = lin(keys[2], num_edge_feat, hidden_dim)
    params["wpo"], params["bpo"] = lin(keys[3], hidden_dim, out_dim)
    whp_w, params["bhp"] = lin(keys[4], hidden_dim + out_dim, out_dim)
    params["whp_h"] = whp_w[:hidden_dim]   # applied to h (first in the concat)
    params["whp_p"] = whp_w[hidden_dim:]   # applied to p
    params["w1"], params["b1"] = lin(keys[5], out_dim, out_dim // 2)
    params["w2"], params["b2"] = lin(keys[6], out_dim // 2, out_dim // 4)
    params["w3"], params["b3"] = lin(keys[7], out_dim // 4, predict_out)
    return params


# ----------------------------------------------------------------------------
# Main
# ----------------------------------------------------------------------------
if __name__ == "__main__":
    # net_params (small, synthetic)
    input_dim = 16
    pos_enc_dim = 8
    num_edge_feat = 4
    hidden_dim = 32
    out_dim = 32
    predict_out = 3

    N_nodes = 16
    N_edges = 32

    key = jax.random.PRNGKey(0)
    k_h, k_e, k_p, k_params = jax.random.split(key, 4)

    h = jax.random.normal(k_h, (N_nodes, input_dim), jnp.float32)
    e = jax.random.normal(k_e, (N_edges, num_edge_feat), jnp.float32)
    p = jax.random.normal(k_p, (N_nodes, pos_enc_dim), jnp.float32)

    params = init_params(k_params, input_dim, pos_enc_dim, num_edge_feat,
                         hidden_dim, out_dim, predict_out)

    scores, h_nodes, p_nodes, e_emb = ggtnet_forward(h, e, p, params)
    jax.block_until_ready((scores, h_nodes, p_nodes, e_emb))

    assert scores.shape == (1, predict_out)
    assert h_nodes.shape == (N_nodes, out_dim)
    assert p_nodes.shape == (N_nodes, out_dim)
    assert e_emb.shape == (N_edges, hidden_dim)

    # correctness vs. faithful reference (loose tolerance: folded weights +
    # hardware rsqrt reorder the f32 arithmetic slightly)
    r_scores, r_h, r_p, r_e = _reference_forward(h, e, p, params)
    np.testing.assert_allclose(np.asarray(scores), np.asarray(r_scores), rtol=2e-3, atol=2e-3)
    np.testing.assert_allclose(np.asarray(h_nodes), np.asarray(r_h), rtol=2e-3, atol=2e-3)
    np.testing.assert_allclose(np.asarray(p_nodes), np.asarray(r_p), rtol=2e-3, atol=2e-3)
    np.testing.assert_allclose(np.asarray(e_emb), np.asarray(r_e), rtol=2e-3, atol=2e-3)

    print("KERNEL_OK")
</pallas_src>

<mosaic_0001>
module attributes {stable_mosaic.version = 11 : i64} {
  func.func @_ggtnet_kernel(%arg0: i32, %arg1: memref<16x24xf32, #tpu.memory_space<vmem>>, %arg2: memref<32x4xf32, #tpu.memory_space<vmem>>, %arg3: memref<24x64xf32, #tpu.memory_space<vmem>>, %arg4: memref<1x64xf32, #tpu.memory_space<vmem>>, %arg5: memref<4x32xf32, #tpu.memory_space<vmem>>, %arg6: memref<1x32xf32, #tpu.memory_space<vmem>>, %arg7: memref<32x32xf32, #tpu.memory_space<vmem>>, %arg8: memref<1x32xf32, #tpu.memory_space<vmem>>, %arg9: memref<32x16xf32, #tpu.memory_space<vmem>>, %arg10: memref<1x16xf32, #tpu.memory_space<vmem>>, %arg11: memref<16x8xf32, #tpu.memory_space<vmem>>, %arg12: memref<1x8xf32, #tpu.memory_space<vmem>>, %arg13: memref<8x3xf32, #tpu.memory_space<vmem>>, %arg14: memref<1x3xf32, #tpu.memory_space<vmem>>, %arg15: memref<1x3xf32, #tpu.memory_space<vmem>>, %arg16: memref<16x32xf32, #tpu.memory_space<vmem>>, %arg17: memref<16x32xf32, #tpu.memory_space<vmem>>, %arg18: memref<32x32xf32, #tpu.memory_space<vmem>>) attributes {dimension_semantics = [#tpu.dimension_semantics<arbitrary>], iteration_bounds = array<i64: 1>, scalar_prefetch = 0 : i64, scratch_operands = 0 : i64, tpu.core_type = #tpu.core_type<tc>, window_params = [{pipeline_mode = #tpu.pipeline_mode<synchronous>, transform_indices = @transform_0, window_bounds = array<i64: 16, 24>}, {pipeline_mode = #tpu.pipeline_mode<synchronous>, transform_indices = @transform_1, window_bounds = array<i64: 32, 4>}, {pipeline_mode = #tpu.pipeline_mode<synchronous>, transform_indices = @transform_2, window_bounds = array<i64: 24, 64>}, {pipeline_mode = #tpu.pipeline_mode<synchronous>, transform_indices = @transform_3, window_bounds = array<i64: 1, 64>}, {pipeline_mode = #tpu.pipeline_mode<synchronous>, transform_indices = @transform_4, window_bounds = array<i64: 4, 32>}, {pipeline_mode = #tpu.pipeline_mode<synchronous>, transform_indices = @transform_5, window_bounds = array<i64: 1, 32>}, {pipeline_mode = #tpu.pipeline_mode<synchronous>, transform_indices = @transform_6, window_bounds = array<i64: 32, 32>}, {pipeline_mode = #tpu.pipeline_mode<synchronous>, transform_indices = @transform_7, window_bounds = array<i64: 1, 32>}, {pipeline_mode = #tpu.pipeline_mode<synchronous>, transform_indices = @transform_8, window_bounds = array<i64: 32, 16>}, {pipeline_mode = #tpu.pipeline_mode<synchronous>, transform_indices = @transform_9, window_bounds = array<i64: 1, 16>}, {pipeline_mode = #tpu.pipeline_mode<synchronous>, transform_indices = @transform_10, window_bounds = array<i64: 16, 8>}, {pipeline_mode = #tpu.pipeline_mode<synchronous>, transform_indices = @transform_11, window_bounds = array<i64: 1, 8>}, {pipeline_mode = #tpu.pipeline_mode<synchronous>, transform_indices = @transform_12, window_bounds = array<i64: 8, 3>}, {pipeline_mode = #tpu.pipeline_mode<synchronous>, transform_indices = @transform_13, window_bounds = array<i64: 1, 3>}, {pipeline_mode = #tpu.pipeline_mode<synchronous>, transform_indices = @transform_14, window_bounds = array<i64: 1, 3>}, {pipeline_mode = #tpu.pipeline_mode<synchronous>, transform_indices = @transform_15, window_bounds = array<i64: 16, 32>}, {pipeline_mode = #tpu.pipeline_mode<synchronous>, transform_indices = @transform_16, window_bounds = array<i64: 16, 32>}, {pipeline_mode = #tpu.pipeline_mode<synchronous>, transform_indices = @transform_17, window_bounds = array<i64: 32, 32>}]} {
    %c0 = arith.constant 0 : index
    %c0_0 = arith.constant 0 : index
    %0 = vector.load %arg1[%c0, %c0_0] : memref<16x24xf32, #tpu.memory_space<vmem>>, vector<16x24xf32>
    %c0_1 = arith.constant 0 : index
    %c0_2 = arith.constant 0 : index
    %1 = vector.load %arg3[%c0_1, %c0_2] : memref<24x64xf32, #tpu.memory_space<vmem>>, vector<24x64xf32>
    %cst = arith.constant dense<0.000000e+00> : vector<16x64xf32>
    %2 = tpu.matmul %0, %1, %cst {dimension_numbers = #tpu.dot_dimension_numbers<[1], [0], [0], [1], [0, 0, 1, 1], [], []>} : vector<16x24xf32>, vector<24x64xf32>, vector<16x64xf32> -> vector<16x64xf32>
    %c0_3 = arith.constant 0 : index
    %c0_4 = arith.constant 0 : index
    %3 = vector.load %arg4[%c0_3, %c0_4] : memref<1x64xf32, #tpu.memory_space<vmem>>, vector<1x64xf32>
    %4 = vector.broadcast %3 : vector<1x64xf32> to vector<16x64xf32>
    %5 = arith.addf %2, %4 : vector<16x64xf32>
    %6 = vector.extract_strided_slice %5 {offsets = [0, 0], sizes = [16, 32], strides = [1, 1]} : vector<16x64xf32> to vector<16x32xf32>
    %7 = vector.extract_strided_slice %5 {offsets = [0, 32], sizes = [16, 32], strides = [1, 1]} : vector<16x64xf32> to vector<16x32xf32>
    %cst_5 = arith.constant dense<0.000000e+00> : vector<32xf32>
    %8 = vector.multi_reduction <add>, %7, %cst_5 [0] : vector<16x32xf32> to vector<32xf32>
    %9 = vector.shape_cast %8 : vector<32xf32> to vector<1x32xf32>
    %cst_6 = arith.constant 6.250000e-02 : f32
    %10 = vector.broadcast %cst_6 : f32 to vector<1x32xf32>
    %11 = arith.mulf %9, %10 : vector<1x32xf32>
    %12 = vector.broadcast %11 : vector<1x32xf32> to vector<16x32xf32>
    %13 = arith.subf %7, %12 : vector<16x32xf32>
    %14 = arith.mulf %13, %13 : vector<16x32xf32>
    %cst_7 = arith.constant dense<0.000000e+00> : vector<32xf32>
    %15 = vector.multi_reduction <add>, %14, %cst_7 [0] : vector<16x32xf32> to vector<32xf32>
    %16 = vector.shape_cast %15 : vector<32xf32> to vector<1x32xf32>
    %17 = math.rsqrt %16 : vector<1x32xf32>
    %18 = vector.broadcast %17 : vector<1x32xf32> to vector<16x32xf32>
    %19 = arith.mulf %13, %18 : vector<16x32xf32>
    %c0_8 = arith.constant 0 : index
    %c0_9 = arith.constant 0 : index
    %20 = vector.load %arg7[%c0_8, %c0_9] : memref<32x32xf32, #tpu.memory_space<vmem>>, vector<32x32xf32>
    %cst_10 = arith.constant dense<0.000000e+00> : vector<16x32xf32>
    %21 = tpu.matmul %19, %20, %cst_10 {dimension_numbers = #tpu.dot_dimension_numbers<[1], [0], [0], [1], [0, 0, 1, 1], [], []>} : vector<16x32xf32>, vector<32x32xf32>, vector<16x32xf32> -> vector<16x32xf32>
    %22 = arith.addf %6, %21 : vector<16x32xf32>
    %c0_11 = arith.constant 0 : index
    %c0_12 = arith.constant 0 : index
    %23 = vector.load %arg8[%c0_11, %c0_12] : memref<1x32xf32, #tpu.memory_space<vmem>>, vector<1x32xf32>
    %24 = vector.broadcast %23 : vector<1x32xf32> to vector<16x32xf32>
    %25 = arith.addf %22, %24 : vector<16x32xf32>
    %cst_13 = arith.constant dense<0.000000e+00> : vector<32xf32>
    %26 = vector.multi_reduction <add>, %25, %cst_13 [0] : vector<16x32xf32> to vector<32xf32>
    %27 = vector.shape_cast %26 : vector<32xf32> to vector<1x32xf32>
    %cst_14 = arith.constant 6.250000e-02 : f32
    %28 = vector.broadcast %cst_14 : f32 to vector<1x32xf32>
    %29 = arith.mulf %27, %28 : vector<1x32xf32>
    %c0_15 = arith.constant 0 : index
    %c0_16 = arith.constant 0 : index
    %30 = vector.load %arg9[%c0_15, %c0_16] : memref<32x16xf32, #tpu.memory_space<vmem>>, vector<32x16xf32>
    %cst_17 = arith.constant dense<0.000000e+00> : vector<1x16xf32>
    %31 = tpu.matmul %29, %30, %cst_17 {dimension_numbers = #tpu.dot_dimension_numbers<[1], [0], [0], [1], [0, 0, 1, 1], [], []>} : vector<1x32xf32>, vector<32x16xf32>, vector<1x16xf32> -> vector<1x16xf32>
    %c0_18 = arith.constant 0 : index
    %c0_19 = arith.constant 0 : index
    %32 = vector.load %arg10[%c0_18, %c0_19] : memref<1x16xf32, #tpu.memory_space<vmem>>, vector<1x16xf32>
    %33 = arith.addf %31, %32 : vector<1x16xf32>
    %cst_20 = arith.constant 0.000000e+00 : f32
    %34 = vector.broadcast %cst_20 : f32 to vector<1x16xf32>
    %35 = arith.maximumf %33, %34 : vector<1x16xf32>
    %c0_21 = arith.constant 0 : index
    %c0_22 = arith.constant 0 : index
    %36 = vector.load %arg11[%c0_21, %c0_22] : memref<16x8xf32, #tpu.memory_space<vmem>>, vector<16x8xf32>
    %cst_23 = arith.constant dense<0.000000e+00> : vector<1x8xf32>
    %37 = tpu.matmul %35, %36, %cst_23 {dimension_numbers = #tpu.dot_dimension_numbers<[1], [0], [0], [1], [0, 0, 1, 1], [], []>} : vector<1x16xf32>, vector<16x8xf32>, vector<1x8xf32> -> vector<1x8xf32>
    %c0_24 = arith.constant 0 : index
    %c0_25 = arith.constant 0 : index
    %38 = vector.load %arg12[%c0_24, %c0_25] : memref<1x8xf32, #tpu.memory_space<vmem>>, vector<1x8xf32>
    %39 = arith.addf %37, %38 : vector<1x8xf32>
    %cst_26 = arith.constant 0.000000e+00 : f32
    %40 = vector.broadcast %cst_26 : f32 to vector<1x8xf32>
    %41 = arith.maximumf %39, %40 : vector<1x8xf32>
    %c0_27 = arith.constant 0 : index
    %c0_28 = arith.constant 0 : index
    %42 = vector.load %arg13[%c0_27, %c0_28] : memref<8x3xf32, #tpu.memory_space<vmem>>, vector<8x3xf32>
    %cst_29 = arith.constant dense<0.000000e+00> : vector<1x3xf32>
    %43 = tpu.matmul %41, %42, %cst_29 {dimension_numbers = #tpu.dot_dimension_numbers<[1], [0], [0], [1], [0, 0, 1, 1], [], []>} : vector<1x8xf32>, vector<8x3xf32>, vector<1x3xf32> -> vector<1x3xf32>
    %c0_30 = arith.constant 0 : index
    %c0_31 = arith.constant 0 : index
    %44 = vector.load %arg14[%c0_30, %c0_31] : memref<1x3xf32, #tpu.memory_space<vmem>>, vector<1x3xf32>
    %45 = arith.addf %43, %44 : vector<1x3xf32>
    %c0_32 = arith.constant 0 : index
    %c0_33 = arith.constant 0 : index
    %46 = vector.load %arg2[%c0_32, %c0_33] : memref<32x4xf32, #tpu.memory_space<vmem>>, vector<32x4xf32>
    %c0_34 = arith.constant 0 : index
    %c0_35 = arith.constant 0 : index
    %47 = vector.load %arg5[%c0_34, %c0_35] : memref<4x32xf32, #tpu.memory_space<vmem>>, vector<4x32xf32>
    %cst_36 = arith.constant dense<0.000000e+00> : vector<32x32xf32>
    %48 = tpu.matmul %46, %47, %cst_36 {dimension_numbers = #tpu.dot_dimension_numbers<[1], [0], [0], [1], [0, 0, 1, 1], [], []>} : vector<32x4xf32>, vector<4x32xf32>, vector<32x32xf32> -> vector<32x32xf32>
    %c0_37 = arith.constant 0 : index
    %c0_38 = arith.constant 0 : index
    %49 = vector.load %arg6[%c0_37, %c0_38] : memref<1x32xf32, #tpu.memory_space<vmem>>, vector<1x32xf32>
    %50 = vector.broadcast %49 : vector<1x32xf32> to vector<32x32xf32>
    %51 = arith.addf %48, %50 : vector<32x32xf32>
    %c0_39 = arith.constant 0 : index
    %c0_40 = arith.constant 0 : index
    %52 = vector.load %arg15[%c0_39, %c0_40] : memref<1x3xf32, #tpu.memory_space<vmem>>, vector<1x3xf32>
    tpu.vector_store %arg15[%c0_39, %c0_40], %45 {strides = array<i32>} : memref<1x3xf32, #tpu.memory_space<vmem>>, vector<1x3xf32>,
    %c0_41 = arith.constant 0 : index
    %c0_42 = arith.constant 0 : index
    %53 = vector.load %arg16[%c0_41, %c0_42] : memref<16x32xf32, #tpu.memory_space<vmem>>, vector<16x32xf32>
    tpu.vector_store %arg16[%c0_41, %c0_42], %25 {strides = array<i32>} : memref<16x32xf32, #tpu.memory_space<vmem>>, vector<16x32xf32>,
    %c0_43 = arith.constant 0 : index
    %c0_44 = arith.constant 0 : index
    %54 = vector.load %arg17[%c0_43, %c0_44] : memref<16x32xf32, #tpu.memory_space<vmem>>, vector<16x32xf32>
    tpu.vector_store %arg17[%c0_43, %c0_44], %19 {strides = array<i32>} : memref<16x32xf32, #tpu.memory_space<vmem>>, vector<16x32xf32>,
    %c0_45 = arith.constant 0 : index
    %c0_46 = arith.constant 0 : index
    %55 = vector.load %arg18[%c0_45, %c0_46] : memref<32x32xf32, #tpu.memory_space<vmem>>, vector<32x32xf32>
    tpu.vector_store %arg18[%c0_45, %c0_46], %51 {strides = array<i32>} : memref<32x32xf32, #tpu.memory_space<vmem>>, vector<32x32xf32>,
    return
  }
  func.func @transform_0(%arg0: i32) -> (i32, i32) {
    %c0_i32 = arith.constant 0 : i32
    %c0_i32_0 = arith.constant 0 : i32
    %c0_i32_1 = arith.constant 0 : i32
    return %c0_i32, %c0_i32_0 : i32, i32
  }
  func.func @transform_1(%arg0: i32) -> (i32, i32) {
    %c0_i32 = arith.constant 0 : i32
    %c0_i32_0 = arith.constant 0 : i32
    %c0_i32_1 = arith.constant 0 : i32
    return %c0_i32, %c0_i32_0 : i32, i32
  }
  func.func @transform_2(%arg0: i32) -> (i32, i32) {
    %c0_i32 = arith.constant 0 : i32
    %c0_i32_0 = arith.constant 0 : i32
    %c0_i32_1 = arith.constant 0 : i32
    return %c0_i32, %c0_i32_0 : i32, i32
  }
  func.func @transform_3(%arg0: i32) -> (i32, i32) {
    %c0_i32 = arith.constant 0 : i32
    %c0_i32_0 = arith.constant 0 : i32
    %c0_i32_1 = arith.constant 0 : i32
    return %c0_i32, %c0_i32_0 : i32, i32
  }
  func.func @transform_4(%arg0: i32) -> (i32, i32) {
    %c0_i32 = arith.constant 0 : i32
    %c0_i32_0 = arith.constant 0 : i32
    %c0_i32_1 = arith.constant 0 : i32
    return %c0_i32, %c0_i32_0 : i32, i32
  }
  func.func @transform_5(%arg0: i32) -> (i32, i32) {
    %c0_i32 = arith.constant 0 : i32
    %c0_i32_0 = arith.constant 0 : i32
    %c0_i32_1 = arith.constant 0 : i32
    return %c0_i32, %c0_i32_0 : i32, i32
  }
  func.func @transform_6(%arg0: i32) -> (i32, i32) {
    %c0_i32 = arith.constant 0 : i32
    %c0_i32_0 = arith.constant 0 : i32
    %c0_i32_1 = arith.constant 0 : i32
    return %c0_i32, %c0_i32_0 : i32, i32
  }
  func.func @transform_7(%arg0: i32) -> (i32, i32) {
    %c0_i32 = arith.constant 0 : i32
    %c0_i32_0 = arith.constant 0 : i32
    %c0_i32_1 = arith.constant 0 : i32
    return %c0_i32, %c0_i32_0 : i32, i32
  }
  func.func @transform_8(%arg0: i32) -> (i32, i32) {
    %c0_i32 = arith.constant 0 : i32
    %c0_i32_0 = arith.constant 0 : i32
    %c0_i32_1 = arith.constant 0 : i32
    return %c0_i32, %c0_i32_0 : i32, i32
  }
  func.func @transform_9(%arg0: i32) -> (i32, i32) {
    %c0_i32 = arith.constant 0 : i32
    %c0_i32_0 = arith.constant 0 : i32
    %c0_i32_1 = arith.constant 0 : i32
    return %c0_i32, %c0_i32_0 : i32, i32
  }
  func.func @transform_10(%arg0: i32) -> (i32, i32) {
    %c0_i32 = arith.constant 0 : i32
    %c0_i32_0 = arith.constant 0 : i32
    %c0_i32_1 = arith.constant 0 : i32
    return %c0_i32, %c0_i32_0 : i32, i32
  }
  func.func @transform_11(%arg0: i32) -> (i32, i32) {
    %c0_i32 = arith.constant 0 : i32
    %c0_i32_0 = arith.constant 0 : i32
    %c0_i32_1 = arith.constant 0 : i32
    return %c0_i32, %c0_i32_0 : i32, i32
  }
  func.func @transform_12(%arg0: i32) -> (i32, i32) {
    %c0_i32 = arith.constant 0 : i32
    %c0_i32_0 = arith.constant 0 : i32
    %c0_i32_1 = arith.constant 0 : i32
    return %c0_i32, %c0_i32_0 : i32, i32
  }
  func.func @transform_13(%arg0: i32) -> (i32, i32) {
    %c0_i32 = arith.constant 0 : i32
    %c0_i32_0 = arith.constant 0 : i32
    %c0_i32_1 = arith.constant 0 : i32
    return %c0_i32, %c0_i32_0 : i32, i32
  }
  func.func @transform_14(%arg0: i32) -> (i32, i32) {
    %c0_i32 = arith.constant 0 : i32
    %c0_i32_0 = arith.constant 0 : i32
    %c0_i32_1 = arith.constant 0 : i32
    return %c0_i32, %c0_i32_0 : i32, i32
  }
  func.func @transform_15(%arg0: i32) -> (i32, i32) {
    %c0_i32 = arith.constant 0 : i32
    %c0_i32_0 = arith.constant 0 : i32
    %c0_i32_1 = arith.constant 0 : i32
    return %c0_i32, %c0_i32_0 : i32, i32
  }
  func.func @transform_16(%arg0: i32) -> (i32, i32) {
    %c0_i32 = arith.constant 0 : i32
    %c0_i32_0 = arith.constant 0 : i32
    %c0_i32_1 = arith.constant 0 : i32
    return %c0_i32, %c0_i32_0 : i32, i32
  }
  func.func @transform_17(%arg0: i32) -> (i32, i32) {
    %c0_i32 = arith.constant 0 : i32
    %c0_i32_0 = arith.constant 0 : i32
    %c0_i32_1 = arith.constant 0 : i32
    return %c0_i32, %c0_i32_0 : i32, i32
  }
}

</mosaic_0001>

<llo_original>
// kernel: ggtnet_forward.1
$region0: #{ggtnet_forward.1}
  #allocation0 [shape = 'u32[]', space=smem, size = 0x4, offset = 0x4, fixed_abs, tag = 'smem constant byte address 0x4 - core index']
  #allocation1 [shape = 'u32[144,128]{1,0:T(1,128)}', space=vmem, size = 0x12000, scoped, tag = 'internal scratch']
  %s0 = inlined_call_operand.vmem [shape: f32[16,24], index: 0, kind: input, shape index: {}]
  %s1 = inlined_call_operand.vmem [shape: f32[32,4], index: 1, kind: input, shape index: {}]
  %s2 = inlined_call_operand.vmem [shape: f32[24,64], index: 2, kind: input, shape index: {}]
  %s3 = inlined_call_operand.vmem [shape: f32[1,64], index: 3, kind: input, shape index: {}]
  %s4 = inlined_call_operand.vmem [shape: f32[4,32], index: 4, kind: input, shape index: {}]
  %s5 = inlined_call_operand.vmem [shape: f32[1,32], index: 5, kind: input, shape index: {}]
  %s6 = inlined_call_operand.vmem [shape: f32[32,32], index: 6, kind: input, shape index: {}]
  %s7 = inlined_call_operand.vmem [shape: f32[1,32], index: 7, kind: input, shape index: {}]
  %s8 = inlined_call_operand.vmem [shape: f32[32,16], index: 8, kind: input, shape index: {}]
  %s9 = inlined_call_operand.vmem [shape: f32[1,16], index: 9, kind: input, shape index: {}]
  %s10 = inlined_call_operand.vmem [shape: f32[16,8], index: 10, kind: input, shape index: {}]
  %s11 = inlined_call_operand.vmem [shape: f32[1,8], index: 11, kind: input, shape index: {}]
  %s12 = inlined_call_operand.vmem [shape: f32[8,3], index: 12, kind: input, shape index: {}]
  %s13 = inlined_call_operand.vmem [shape: f32[1,3], index: 13, kind: input, shape index: {}]
  %s14 = inlined_call_operand.hbm [shape: f32[1,3], index: 14, kind: output, shape index: {0}]
  %s15 = inlined_call_operand.hbm [shape: f32[16,32], index: 15, kind: output, shape index: {1}]
  %s16 = inlined_call_operand.hbm [shape: f32[16,32], index: 16, kind: output, shape index: {2}]
  %s17 = inlined_call_operand.hbm [shape: f32[32,32], index: 17, kind: output, shape index: {3}]
  %18 = xla_tuple %s14, %s15, %s16, %s17
  %s19 = sld [smem:[#allocation0]]
  $region90: #{ggtnet_forward.1} parent=0
    _
  %s21 = ssub.s32 1, %s19
  %s22 = scalar_select 0, %s21, %s19
  $region1: #{ggtnet_forward.1} parent=0
    #allocation2 [shape = 'u8[512]{0}', space=vmem, size = 0x400, scoped, tag = 'output window, operand 0, single buffered']
    #allocation3 [shape = 's32[1]{0}', space=sflag, size = 0x4, scoped, tag = 'scoped memory for ggtnet_forward.1']
    #allocation4 [shape = 'u8[8192]{0}', space=vmem, size = 0x2000, scoped, tag = 'output window, operand 1, single buffered']
    #allocation5 [shape = 's32[1]{0}', space=sflag, size = 0x4, scoped, tag = 'scoped memory for ggtnet_forward.1']
    #allocation6 [shape = 'u8[8192]{0}', space=vmem, size = 0x2000, scoped, tag = 'output window, operand 2, single buffered']
    #allocation7 [shape = 'u8[16384]{0}', space=vmem, size = 0x4000, scoped, tag = 'output window, operand 3, single buffered']
    #allocation8 [shape = 's32[1]{0}', space=sflag, size = 0x4, scoped, tag = 'scoped memory for ggtnet_forward.1']
    %23 = vsyncpa [#allocation3], 0
    %24 = vsyncpa [#allocation5], 0
    %25 = vsyncpa [#allocation8], 0
    // Predicated region
    $region2: #{ggtnet_forward.1} parent=1 // pred_check
      _
    $region3: #{ggtnet_forward.1} parent=1 // pred_check_branch
      %27 = sbr.rel (0) target = $region5
    $region4: #{ggtnet_forward.1} parent=1 // pred_region
      _
    $region5: #{ggtnet_forward.1} parent=1 // pred_fallthru
      _
    // Predicated region
    $region6: #{ggtnet_forward.1} parent=1 // pred_check
      _
    $region7: #{ggtnet_forward.1} parent=1 // pred_check_branch
      %29 = sbr.rel (0) target = $region9
    $region8: #{ggtnet_forward.1} parent=1 // pred_region
      _
    $region9: #{ggtnet_forward.1} parent=1 // pred_fallthru
      _
    // Predicated region
    $region10: #{ggtnet_forward.1} parent=1 // pred_check
      _
    $region11: #{ggtnet_forward.1} parent=1 // pred_check_branch
      %31 = sbr.rel (0) target = $region13
    $region12: #{ggtnet_forward.1} parent=1 // pred_region
      _
    $region13: #{ggtnet_forward.1} parent=1 // pred_fallthru
      _
    // Predicated region
    $region14: #{ggtnet_forward.1} parent=1 // pred_check
      _
    $region15: #{ggtnet_forward.1} parent=1 // pred_check_branch
      %33 = sbr.rel (0) target = $region17
    $region16: #{ggtnet_forward.1} parent=1 // pred_region
      _
    $region17: #{ggtnet_forward.1} parent=1 // pred_fallthru
      _
    // Predicated region
    $region18: #{ggtnet_forward.1} parent=1 // pred_check
      _
    $region19: #{ggtnet_forward.1} parent=1 // pred_check_branch
      %35 = sbr.rel (0) target = $region21
    $region20: #{ggtnet_forward.1} parent=1 // pred_region
      _
    $region21: #{ggtnet_forward.1} parent=1 // pred_fallthru
      _
    // Predicated region
    $region22: #{ggtnet_forward.1} parent=1 // pred_check
      _
    $region23: #{ggtnet_forward.1} parent=1 // pred_check_branch
      %37 = sbr.rel (0) target = $region25
    $region24: #{ggtnet_forward.1} parent=1 // pred_region
      _
    $region25: #{ggtnet_forward.1} parent=1 // pred_fallthru
      _
    // Predicated region
    $region26: #{ggtnet_forward.1} parent=1 // pred_check
      _
    $region27: #{ggtnet_forward.1} parent=1 // pred_check_branch
      %39 = sbr.rel (0) target = $region29
    $region28: #{ggtnet_forward.1} parent=1 // pred_region
      _
    $region29: #{ggtnet_forward.1} parent=1 // pred_fallthru
      _
    // Predicated region
    $region30: #{ggtnet_forward.1} parent=1 // pred_check
      _
    $region31: #{ggtnet_forward.1} parent=1 // pred_check_branch
      %41 = sbr.rel (0) target = $region33
    $region32: #{ggtnet_forward.1} parent=1 // pred_region
      _
    $region33: #{ggtnet_forward.1} parent=1 // pred_fallthru
      _
    // Predicated region
    $region34: #{ggtnet_forward.1} parent=1 // pred_check
      _
    $region35: #{ggtnet_forward.1} parent=1 // pred_check_branch
      %43 = sbr.rel (0) target = $region37
    $region36: #{ggtnet_forward.1} parent=1 // pred_region
      _
    $region37: #{ggtnet_forward.1} parent=1 // pred_fallthru
      _
    // Predicated region
    $region38: #{ggtnet_forward.1} parent=1 // pred_check
      _
    $region39: #{ggtnet_forward.1} parent=1 // pred_check_branch
      %45 = sbr.rel (0) target = $region41
    $region40: #{ggtnet_forward.1} parent=1 // pred_region
      _
    $region41: #{ggtnet_forward.1} parent=1 // pred_fallthru
      _
    // Predicated region
    $region42: #{ggtnet_forward.1} parent=1 // pred_check
      _
    $region43: #{ggtnet_forward.1} parent=1 // pred_check_branch
      %47 = sbr.rel (0) target = $region45
    $region44: #{ggtnet_forward.1} parent=1 // pred_region
      _
    $region45: #{ggtnet_forward.1} parent=1 // pred_fallthru
      _
    // Predicated region
    $region46: #{ggtnet_forward.1} parent=1 // pred_check
      _
    $region47: #{ggtnet_forward.1} parent=1 // pred_check_branch
      %49 = sbr.rel (0) target = $region49
    $region48: #{ggtnet_forward.1} parent=1 // pred_region
      _
    $region49: #{ggtnet_forward.1} parent=1 // pred_fallthru
      _
    // Predicated region
    $region50: #{ggtnet_forward.1} parent=1 // pred_check
      _
    $region51: #{ggtnet_forward.1} parent=1 // pred_check_branch
      %51 = sbr.rel (0) target = $region53
    $region52: #{ggtnet_forward.1} parent=1 // pred_region
      _
    $region53: #{ggtnet_forward.1} parent=1 // pred_fallthru
      _
    // Predicated region
    $region54: #{ggtnet_forward.1} parent=1 // pred_check
      _
    $region55: #{ggtnet_forward.1} parent=1 // pred_check_branch
      %53 = sbr.rel (0) target = $region57
    $region56: #{ggtnet_forward.1} parent=1 // pred_region
      _
    $region57: #{ggtnet_forward.1} parent=1 // pred_fallthru
      _
    %v54 = vld [vmem:[%s0] sm:$0xff]
    %v55 = vld [vmem:[%s0 + $0x8] sm:$0xff]
    %v56 = vld [vmem:[%s2] sm:$0xff]
    %v57 = vld [vmem:[%s2 + $0x8] sm:$0xff]
    %v58 = vld [vmem:[%s2 + $0x10] sm:$0xff]
    %v59 = vld [vmem:[%s3] sm:$0x1]
    %v61 = vlaneseq
    %v62 = vshrl.u32 %v61, 7
    %v63 = vsub.s32 0, %v62
    %v64 = vrot.slane %v59, %v63
    %vm66 = vcmask 195584
    %v68 = vsel %vm66, %v54, 0
    %v71 = vsel %vm66, %v55, 0
    %73 = vmatprep.subr.mxu0 0.0
    %74 = vmatpush1.msra.mxu0 0.0
    %75 = vmatprep.subr.mxu0 0.0
    %76 = vmatpush1.msra.mxu0 0.0
    %77 = vmatprep.subr.mxu0 0.0
    %78 = vmatpush1.msra.mxu0 0.0
    %79 = vmatprep.subr.mxu0 0.0
    %80 = vmatpush1.msra.mxu0 0.0
    %81 = vmatprep.subr.mxu0 0.0
    %82 = vmatpush1.msra.mxu0 0.0
    %83 = vmatprep.subr.mxu0 0.0
    %84 = vmatpush1.msra.mxu0 0.0
    %85 = vmatprep.subr.mxu0 0.0
    %86 = vmatpush1.msra.mxu0 0.0
    %87 = vmatprep.subr.mxu0 0.0
    %88 = vmatpush1.msra.mxu0 0.0
    %89 = vmatprep.subr.mxu0 0.0
    %90 = vmatpush1.msra.mxu0 0.0
    %91 = vmatprep.subr.mxu0 0.0
    %92 = vmatpush1.msra.mxu0 0.0
    %93 = vmatprep.subr.mxu0 0.0
    %94 = vmatpush1.msra.mxu0 0.0
    %95 = vmatprep.subr.mxu0 0.0
    %96 = vmatpush1.msra.mxu0 0.0
    %97 = vmatprep.subr.mxu0 0.0
    %98 = vmatpush1.msra.mxu0 0.0
    %99 = vmatprep.subr.mxu0 0.0
    %100 = vmatpush1.msra.mxu0 %v58
    %101 = vmatprep.subr.mxu0 0.0
    %102 = vmatpush1.msra.mxu0 %v57
    %103 = vmatprep.subr.mxu0 0.0
    %104 = vmatpush1.msra.mxu0 %v56
    %105 = vmatprep.subr.mxu0 0.0
    %106 = vmatpush2.msra.mxu0 0.0
    %107 = vmatprep.subr.mxu0 0.0
    %108 = vmatpush2.msra.mxu0 0.0
    %109 = vmatprep.subr.mxu0 0.0
    %110 = vmatpush2.msra.mxu0 0.0
    %111 = vmatprep.subr.mxu0 0.0
    %112 = vmatpush2.msra.mxu0 0.0
    %113 = vmatprep.subr.mxu0 0.0
    %114 = vmatpush2.msra.mxu0 0.0
    %115 = vmatprep.subr.mxu0 0.0
    %116 = vmatpush2.msra.mxu0 0.0
    %117 = vmatprep.subr.mxu0 0.0
    %118 = vmatpush2.msra.mxu0 0.0
    %119 = vmatprep.subr.mxu0 0.0
    %120 = vmatpush2.msra.mxu0 0.0
    %121 = vmatprep.subr.mxu0 0.0
    %122 = vmatpush2.msra.mxu0 0.0
    %123 = vmatprep.subr.mxu0 0.0
    %124 = vmatpush2.msra.mxu0 0.0
    %125 = vmatprep.subr.mxu0 0.0
    %126 = vmatpush2.msra.mxu0 0.0
    %127 = vmatprep.subr.mxu0 0.0
    %128 = vmatpush2.msra.mxu0 0.0
    %129 = vmatprep.subr.mxu0 0.0
    %130 = vmatpush2.msra.mxu0 0.0
    %131 = vmatprep.subr.mxu0 0.0
    %132 = vmatpush2.msra.mxu0 0.0
    %133 = vmatprep.subr.mxu0 0.0
    %134 = vmatpush2.msra.mxu0 0.0
    %135 = vmatprep.subr.mxu0 0.0
    %136 = vmatpush2.msra.mxu0 0.0
    %137 = vmatprep.mubr.f32.mxu0 0.0
    %138 = vmatmul.mubr.f32.gmra.mxu0 %v68
    %v139 = vpop.f32.mrf.mxu0
    %v140 = vadd.f32 %v64, %v139
    %v141 = vpop.f32.mrf.mxu0
    %142 = vmatprep.mubr.f32.mxu0 0.0
    %143 = vmatmul.mubr.f32.gmra.mxu0 %v71
    %v144 = vpop.f32.mrf.mxu0
    %v145 = vadd.f32 %v64, %v144
    %v146 = vpop.f32.mrf.mxu0
    %147 = vdwg.mxu0
    %vm148 = vcmask 523520
    %v149 = vsel %vm148, %v140, 0.0
    %v150 = vsel %vm148, %v145, 0.0
    %v151 = vadd.f32 %v149, %v150
    %v152 = vrot.slane %v151, 4
    %v153 = vadd.f32 %v151, %v152
    %v154 = vrot.slane %v153, 2
    %v155 = vadd.f32 %v153, %v154
    %v156 = vrot.slane %v155, 1
    %v157 = vadd.f32 %v155, %v156
    %v158 = vmul.f32 %v157, 0.0625
    %v159 = vsub.f32 %v140, %v158
    %v160 = vsub.f32 %v145, %v158
    %v161 = vmul.f32 %v159, %v159
    %v162 = vmul.f32 %v160, %v160
    %v163 = vsel %vm148, %v161, 0.0
    %v164 = vsel %vm148, %v162, 0.0
    %v165 = vadd.f32 %v163, %v164
    %v166 = vrot.slane %v165, 4
    %v167 = vadd.f32 %v165, %v166
    %v168 = vrot.slane %v167, 2
    %v169 = vadd.f32 %v167, %v168
    %v170 = vrot.slane %v169, 1
    %v171 = vadd.f32 %v169, %v170
    %v172 = vrsqrt.pop %v171
    %v173 = vmul.f32 %v159, %v172
    %v174 = vmul.f32 %v160, %v172
    %v175 = vld [vmem:[%s6] sm:$0xff]
    %v176 = vld [vmem:[%s6 + $0x8] sm:$0xff]
    %v177 = vld [vmem:[%s6 + $0x10] sm:$0xff]
    %v178 = vld [vmem:[%s6 + $0x18] sm:$0xff]
    %181 = vrot.lane.b32.xlu0 %v173, 96
    %v182 = vpop.permute.xlu0 %181
    %183 = vrot.lane.b32.xlu0 %v174, 96
    %v184 = vpop.permute.xlu0 %183
    %vm185 = vcmask 261120
    %v186 = vsel %vm185, %v182, 0
    %v188 = vsel %vm185, %v184, 0
    %190 = vmatprep.subr.mxu0 0.0
    %191 = vmatpush1.msra.mxu0 0.0
    %192 = vmatprep.subr.mxu0 0.0
    %193 = vmatpush1.msra.mxu0 0.0
    %194 = vmatprep.subr.mxu0 0.0
    %195 = vmatpush1.msra.mxu0 0.0
    %196 = vmatprep.subr.mxu0 0.0
    %197 = vmatpush1.msra.mxu0 0.0
    %198 = vmatprep.subr.mxu0 0.0
    %199 = vmatpush1.msra.mxu0 0.0
    %200 = vmatprep.subr.mxu0 0.0
    %201 = vmatpush1.msra.mxu0 0.0
    %202 = vmatprep.subr.mxu0 0.0
    %203 = vmatpush1.msra.mxu0 0.0
    %204 = vmatprep.subr.mxu0 0.0
    %205 = vmatpush1.msra.mxu0 0.0
    %206 = vmatprep.subr.mxu0 0.0
    %207 = vmatpush1.msra.mxu0 0.0
    %208 = vmatprep.subr.mxu0 0.0
    %209 = vmatpush1.msra.mxu0 0.0
    %210 = vmatprep.subr.mxu0 0.0
    %211 = vmatpush1.msra.mxu0 0.0
    %212 = vmatprep.subr.mxu0 0.0
    %213 = vmatpush1.msra.mxu0 0.0
    %214 = vmatprep.subr.mxu0 0.0
    %215 = vmatpush1.msra.mxu0 %v178
    %216 = vmatprep.subr.mxu0 0.0
    %217 = vmatpush1.msra.mxu0 %v177
    %218 = vmatprep.subr.mxu0 0.0
    %219 = vmatpush1.msra.mxu0 %v176
    %220 = vmatprep.subr.mxu0 0.0
    %221 = vmatpush1.msra.mxu0 %v175
    %222 = vmatprep.subr.mxu0 0.0
    %223 = vmatpush2.msra.mxu0 0.0
    %224 = vmatprep.subr.mxu0 0.0
    %225 = vmatpush2.msra.mxu0 0.0
    %226 = vmatprep.subr.mxu0 0.0
    %227 = vmatpush2.msra.mxu0 0.0
    %228 = vmatprep.subr.mxu0 0.0
    %229 = vmatpush2.msra.mxu0 0.0
    %230 = vmatprep.subr.mxu0 0.0
    %231 = vmatpush2.msra.mxu0 0.0
    %232 = vmatprep.subr.mxu0 0.0
    %233 = vmatpush2.msra.mxu0 0.0
    %234 = vmatprep.subr.mxu0 0.0
    %235 = vmatpush2.msra.mxu0 0.0
    %236 = vmatprep.subr.mxu0 0.0
    %237 = vmatpush2.msra.mxu0 0.0
    %238 = vmatprep.subr.mxu0 0.0
    %239 = vmatpush2.msra.mxu0 0.0
    %240 = vmatprep.subr.mxu0 0.0
    %241 = vmatpush2.msra.mxu0 0.0
    %242 = vmatprep.subr.mxu0 0.0
    %243 = vmatpush2.msra.mxu0 0.0
    %244 = vmatprep.subr.mxu0 0.0
    %245 = vmatpush2.msra.mxu0 0.0
    %246 = vmatprep.subr.mxu0 0.0
    %247 = vmatpush2.msra.mxu0 0.0
    %248 = vmatprep.subr.mxu0 0.0
    %249 = vmatpush2.msra.mxu0 0.0
    %250 = vmatprep.subr.mxu0 0.0
    %251 = vmatpush2.msra.mxu0 0.0
    %252 = vmatprep.subr.mxu0 0.0
    %253 = vmatpush2.msra.mxu0 0.0
    %254 = vmatprep.mubr.f32.mxu0 0.0
    %255 = vmatmul.mubr.f32.gmra.mxu0 %v186
    %v256 = vpop.f32.mrf.mxu0
    %v257 = vadd.f32 0.0, %v256
    %v258 = vpop.f32.mrf.mxu0
    %259 = vmatprep.mubr.f32.mxu0 0.0
    %260 = vmatmul.mubr.f32.gmra.mxu0 %v188
    %v261 = vpop.f32.mrf.mxu0
    %v262 = vadd.f32 0.0, %v261
    %v263 = vpop.f32.mrf.mxu0
    %264 = vdwg.mxu0
    %v265 = vadd.f32 %v140, %v257
    %v266 = vadd.f32 %v145, %v262
    %v267 = vld [vmem:[%s7] sm:$0x1]
    %v269 = vlaneseq
    %v270 = vshrl.u32 %v269, 7
    %v271 = vsub.s32 0, %v270
    %v272 = vrot.slane %v267, %v271
    %v274 = vadd.f32 %v265, %v272
    %v275 = vadd.f32 %v266, %v272
    %v276 = vsel %vm185, %v274, 0.0
    %v277 = vsel %vm185, %v275, 0.0
    %v278 = vadd.f32 %v276, %v277
    %v279 = vrot.slane %v278, 4
    %v280 = vadd.f32 %v278, %v279
    %v281 = vrot.slane %v280, 2
    %v282 = vadd.f32 %v280, %v281
    %v283 = vrot.slane %v282, 1
    %v284 = vadd.f32 %v282, %v283
    %v285 = vmul.f32 %v284, 0.0625
    %v286 = vld [vmem:[%s8] sm:$0xff]
    %v287 = vld [vmem:[%s8 + $0x8] sm:$0xff]
    %v288 = vld [vmem:[%s8 + $0x10] sm:$0xff]
    %v289 = vld [vmem:[%s8 + $0x18] sm:$0xff]
    %v290 = vld [vmem:[%s9] sm:$0x1]
    %v292 = vsel %vm185, %v285, 0
    %294 = vmatprep.subr.mxu0 0.0
    %295 = vmatpush1.msra.mxu0 0.0
    %296 = vmatprep.subr.mxu0 0.0
    %297 = vmatpush1.msra.mxu0 0.0
    %298 = vmatprep.subr.mxu0 0.0
    %299 = vmatpush1.msra.mxu0 0.0
    %300 = vmatprep.subr.mxu0 0.0
    %301 = vmatpush1.msra.mxu0 0.0
    %302 = vmatprep.subr.mxu0 0.0
    %303 = vmatpush1.msra.mxu0 0.0
    %304 = vmatprep.subr.mxu0 0.0
    %305 = vmatpush1.msra.mxu0 0.0
    %306 = vmatprep.subr.mxu0 0.0
    %307 = vmatpush1.msra.mxu0 0.0
    %308 = vmatprep.subr.mxu0 0.0
    %309 = vmatpush1.msra.mxu0 0.0
    %310 = vmatprep.subr.mxu0 0.0
    %311 = vmatpush1.msra.mxu0 0.0
    %312 = vmatprep.subr.mxu0 0.0
    %313 = vmatpush1.msra.mxu0 0.0
    %314 = vmatprep.subr.mxu0 0.0
    %315 = vmatpush1.msra.mxu0 0.0
    %316 = vmatprep.subr.mxu0 0.0
    %317 = vmatpush1.msra.mxu0 0.0
    %318 = vmatprep.subr.mxu0 0.0
    %319 = vmatpush1.msra.mxu0 %v289
    %320 = vmatprep.subr.mxu0 0.0
    %321 = vmatpush1.msra.mxu0 %v288
    %322 = vmatprep.subr.mxu0 0.0
    %323 = vmatpush1.msra.mxu0 %v287
    %324 = vmatprep.subr.mxu0 0.0
    %325 = vmatpush1.msra.mxu0 %v286
    %326 = vmatprep.subr.mxu0 0.0
    %327 = vmatpush2.msra.mxu0 0.0
    %328 = vmatprep.subr.mxu0 0.0
    %329 = vmatpush2.msra.mxu0 0.0
    %330 = vmatprep.subr.mxu0 0.0
    %331 = vmatpush2.msra.mxu0 0.0
    %332 = vmatprep.subr.mxu0 0.0
    %333 = vmatpush2.msra.mxu0 0.0
    %334 = vmatprep.subr.mxu0 0.0
    %335 = vmatpush2.msra.mxu0 0.0
    %336 = vmatprep.subr.mxu0 0.0
    %337 = vmatpush2.msra.mxu0 0.0
    %338 = vmatprep.subr.mxu0 0.0
    %339 = vmatpush2.msra.mxu0 0.0
    %340 = vmatprep.subr.mxu0 0.0
    %341 = vmatpush2.msra.mxu0 0.0
    %342 = vmatprep.subr.mxu0 0.0
    %343 = vmatpush2.msra.mxu0 0.0
    %344 = vmatprep.subr.mxu0 0.0
    %345 = vmatpush2.msra.mxu0 0.0
    %346 = vmatprep.subr.mxu0 0.0
    %347 = vmatpush2.msra.mxu0 0.0
    %348 = vmatprep.subr.mxu0 0.0
    %349 = vmatpush2.msra.mxu0 0.0
    %350 = vmatprep.subr.mxu0 0.0
    %351 = vmatpush2.msra.mxu0 0.0
    %352 = vmatprep.subr.mxu0 0.0
    %353 = vmatpush2.msra.mxu0 0.0
    %354 = vmatprep.subr.mxu0 0.0
    %355 = vmatpush2.msra.mxu0 0.0
    %356 = vmatprep.subr.mxu0 0.0
    %357 = vmatpush2.msra.mxu0 0.0
    %358 = vmatprep.mubr.f32.mxu0 0.0
    %359 = vmatmul.mubr.f32.gmra.mxu0 %v292
    %v360 = vpop.f32.mrf.mxu0
    %v361 = vadd.f32 %v290, %v360
    %v362 = vpop.f32.mrf.mxu0
    %363 = vdwg.mxu0
    %v364 = vmax.f32 %v361, 0.0
    %v365 = vld [vmem:[%s10] sm:$0xff]
    %v366 = vld [vmem:[%s10 + $0x8] sm:$0xff]
    %v367 = vld [vmem:[%s11] sm:$0x1]
    %vm368 = vcmask 130048
    %v370 = vsel %vm368, %v364, 0
    %372 = vmatprep.subr.mxu0 0.0
    %373 = vmatpush1.msra.mxu0 0.0
    %374 = vmatprep.subr.mxu0 0.0
    %375 = vmatpush1.msra.mxu0 0.0
    %376 = vmatprep.subr.mxu0 0.0
    %377 = vmatpush1.msra.mxu0 0.0
    %378 = vmatprep.subr.mxu0 0.0
    %379 = vmatpush1.msra.mxu0 0.0
    %380 = vmatprep.subr.mxu0 0.0
    %381 = vmatpush1.msra.mxu0 0.0
    %382 = vmatprep.subr.mxu0 0.0
    %383 = vmatpush1.msra.mxu0 0.0
    %384 = vmatprep.subr.mxu0 0.0
    %385 = vmatpush1.msra.mxu0 0.0
    %386 = vmatprep.subr.mxu0 0.0
    %387 = vmatpush1.msra.mxu0 0.0
    %388 = vmatprep.subr.mxu0 0.0
    %389 = vmatpush1.msra.mxu0 0.0
    %390 = vmatprep.subr.mxu0 0.0
    %391 = vmatpush1.msra.mxu0 0.0
    %392 = vmatprep.subr.mxu0 0.0
    %393 = vmatpush1.msra.mxu0 0.0
    %394 = vmatprep.subr.mxu0 0.0
    %395 = vmatpush1.msra.mxu0 0.0
    %396 = vmatprep.subr.mxu0 0.0
    %397 = vmatpush1.msra.mxu0 0.0
    %398 = vmatprep.subr.mxu0 0.0
    %399 = vmatpush1.msra.mxu0 0.0
    %400 = vmatprep.subr.mxu0 0.0
    %401 = vmatpush1.msra.mxu0 %v366
    %402 = vmatprep.subr.mxu0 0.0
    %403 = vmatpush1.msra.mxu0 %v365
    %404 = vmatprep.subr.mxu0 0.0
    %405 = vmatpush2.msra.mxu0 0.0
    %406 = vmatprep.subr.mxu0 0.0
    %407 = vmatpush2.msra.mxu0 0.0
    %408 = vmatprep.subr.mxu0 0.0
    %409 = vmatpush2.msra.mxu0 0.0
    %410 = vmatprep.subr.mxu0 0.0
    %411 = vmatpush2.msra.mxu0 0.0
    %412 = vmatprep.subr.mxu0 0.0
    %413 = vmatpush2.msra.mxu0 0.0
    %414 = vmatprep.subr.mxu0 0.0
    %415 = vmatpush2.msra.mxu0 0.0
    %416 = vmatprep.subr.mxu0 0.0
    %417 = vmatpush2.msra.mxu0 0.0
    %418 = vmatprep.subr.mxu0 0.0
    %419 = vmatpush2.msra.mxu0 0.0
    %420 = vmatprep.subr.mxu0 0.0
    %421 = vmatpush2.msra.mxu0 0.0
    %422 = vmatprep.subr.mxu0 0.0
    %423 = vmatpush2.msra.mxu0 0.0
    %424 = vmatprep.subr.mxu0 0.0
    %425 = vmatpush2.msra.mxu0 0.0
    %426 = vmatprep.subr.mxu0 0.0
    %427 = vmatpush2.msra.mxu0 0.0
    %428 = vmatprep.subr.mxu0 0.0
    %429 = vmatpush2.msra.mxu0 0.0
    %430 = vmatprep.subr.mxu0 0.0
    %431 = vmatpush2.msra.mxu0 0.0
    %432 = vmatprep.subr.mxu0 0.0
    %433 = vmatpush2.msra.mxu0 0.0
    %434 = vmatprep.subr.mxu0 0.0
    %435 = vmatpush2.msra.mxu0 0.0
    %436 = vmatprep.mubr.f32.mxu0 0.0
    %437 = vmatmul.mubr.f32.gmra.mxu0 %v370
    %v438 = vpop.f32.mrf.mxu0
    %v439 = vadd.f32 %v367, %v438
    %v440 = vpop.f32.mrf.mxu0
    %441 = vdwg.mxu0
    %v442 = vmax.f32 %v439, 0.0
    %v443 = vld [vmem:[%s12] sm:$0xff]
    %v444 = vld [vmem:[%s13] sm:$0x1]
    %vm445 = vcmask 64512
    %v447 = vsel %vm445, %v442, 0
    %449 = vmatprep.subr.mxu0 0.0
    %450 = vmatpush1.msra.mxu0 0.0
    %451 = vmatprep.subr.mxu0 0.0
    %452 = vmatpush1.msra.mxu0 0.0
    %453 = vmatprep.subr.mxu0 0.0
    %454 = vmatpush1.msra.mxu0 0.0
    %455 = vmatprep.subr.mxu0 0.0
    %456 = vmatpush1.msra.mxu0 0.0
    %457 = vmatprep.subr.mxu0 0.0
    %458 = vmatpush1.msra.mxu0 0.0
    %459 = vmatprep.subr.mxu0 0.0
    %460 = vmatpush1.msra.mxu0 0.0
    %461 = vmatprep.subr.mxu0 0.0
    %462 = vmatpush1.msra.mxu0 0.0
    %463 = vmatprep.subr.mxu0 0.0
    %464 = vmatpush1.msra.mxu0 0.0
    %465 = vmatprep.subr.mxu0 0.0
    %466 = vmatpush1.msra.mxu0 0.0
    %467 = vmatprep.subr.mxu0 0.0
    %468 = vmatpush1.msra.mxu0 0.0
    %469 = vmatprep.subr.mxu0 0.0
    %470 = vmatpush1.msra.mxu0 0.0
    %471 = vmatprep.subr.mxu0 0.0
    %472 = vmatpush1.msra.mxu0 0.0
    %473 = vmatprep.subr.mxu0 0.0
    %474 = vmatpush1.msra.mxu0 0.0
    %475 = vmatprep.subr.mxu0 0.0
    %476 = vmatpush1.msra.mxu0 0.0
    %477 = vmatprep.subr.mxu0 0.0
    %478 = vmatpush1.msra.mxu0 0.0
    %479 = vmatprep.subr.mxu0 0.0
    %480 = vmatpush1.msra.mxu0 %v443
    %481 = vmatprep.subr.mxu0 0.0
    %482 = vmatpush2.msra.mxu0 0.0
    %483 = vmatprep.subr.mxu0 0.0
    %484 = vmatpush2.msra.mxu0 0.0
    %485 = vmatprep.subr.mxu0 0.0
    %486 = vmatpush2.msra.mxu0 0.0
    %487 = vmatprep.subr.mxu0 0.0
    %488 = vmatpush2.msra.mxu0 0.0
    %489 = vmatprep.subr.mxu0 0.0
    %490 = vmatpush2.msra.mxu0 0.0
    %491 = vmatprep.subr.mxu0 0.0
    %492 = vmatpush2.msra.mxu0 0.0
    %493 = vmatprep.subr.mxu0 0.0
    %494 = vmatpush2.msra.mxu0 0.0
    %495 = vmatprep.subr.mxu0 0.0
    %496 = vmatpush2.msra.mxu0 0.0
    %497 = vmatprep.subr.mxu0 0.0
    %498 = vmatpush2.msra.mxu0 0.0
    %499 = vmatprep.subr.mxu0 0.0
    %500 = vmatpush2.msra.mxu0 0.0
    %501 = vmatprep.subr.mxu0 0.0
    %502 = vmatpush2.msra.mxu0 0.0
    %503 = vmatprep.subr.mxu0 0.0
    %504 = vmatpush2.msra.mxu0 0.0
    %505 = vmatprep.subr.mxu0 0.0
    %506 = vmatpush2.msra.mxu0 0.0
    %507 = vmatprep.subr.mxu0 0.0
    %508 = vmatpush2.msra.mxu0 0.0
    %509 = vmatprep.subr.mxu0 0.0
    %510 = vmatpush2.msra.mxu0 0.0
    %511 = vmatprep.subr.mxu0 0.0
    %512 = vmatpush2.msra.mxu0 0.0
    %513 = vmatprep.mubr.f32.mxu0 0.0
    %514 = vmatmul.mubr.f32.gmra.mxu0 %v447
    %v515 = vpop.f32.mrf.mxu0
    %v516 = vadd.f32 %v444, %v515
    %v517 = vpop.f32.mrf.mxu0
    %518 = vdwg.mxu0
    %v519 = vld [vmem:[%s1] sm:$0xff]
    %v520 = vld [vmem:[%s1 + $0x8] sm:$0xff]
    %v521 = vld [vmem:[%s1 + $0x10] sm:$0xff]
    %v522 = vld [vmem:[%s1 + $0x18] sm:$0xff]
    %v523 = vld [vmem:[%s4] sm:$0xf]
    %v524 = vld [vmem:[%s5] sm:$0x1]
    %v526 = vlaneseq
    %v527 = vshrl.u32 %v526, 7
    %v528 = vsub.s32 0, %v527
    %v529 = vrot.slane %v524, %v528
    %vm531 = vcmask 31744
    %v533 = vsel %vm531, %v519, 0
    %v536 = vsel %vm531, %v520, 0
    %v539 = vsel %vm531, %v521, 0
    %v542 = vsel %vm531, %v522, 0
    %vm544 = vcmask 1043456
    %v546 = vsel %vm544, %v523, 0
    %548 = vmatprep.subr.mxu0 0.0
    %549 = vmatpush1.msra.mxu0 0.0
    %550 = vmatprep.subr.mxu0 0.0
    %551 = vmatpush1.msra.mxu0 0.0
    %552 = vmatprep.subr.mxu0 0.0
    %553 = vmatpush1.msra.mxu0 0.0
    %554 = vmatprep.subr.mxu0 0.0
    %555 = vmatpush1.msra.mxu0 0.0
    %556 = vmatprep.subr.mxu0 0.0
    %557 = vmatpush1.msra.mxu0 0.0
    %558 = vmatprep.subr.mxu0 0.0
    %559 = vmatpush1.msra.mxu0 0.0
    %560 = vmatprep.subr.mxu0 0.0
    %561 = vmatpush1.msra.mxu0 0.0
    %562 = vmatprep.subr.mxu0 0.0
    %563 = vmatpush1.msra.mxu0 0.0
    %564 = vmatprep.subr.mxu0 0.0
    %565 = vmatpush1.msra.mxu0 0.0
    %566 = vmatprep.subr.mxu0 0.0
    %567 = vmatpush1.msra.mxu0 0.0
    %568 = vmatprep.subr.mxu0 0.0
    %569 = vmatpush1.msra.mxu0 0.0
    %570 = vmatprep.subr.mxu0 0.0
    %571 = vmatpush1.msra.mxu0 0.0
    %572 = vmatprep.subr.mxu0 0.0
    %573 = vmatpush1.msra.mxu0 0.0
    %574 = vmatprep.subr.mxu0 0.0
    %575 = vmatpush1.msra.mxu0 0.0
    %576 = vmatprep.subr.mxu0 0.0
    %577 = vmatpush1.msra.mxu0 0.0
    %578 = vmatprep.subr.mxu0 0.0
    %579 = vmatpush1.msra.mxu0 %v546
    %580 = vmatprep.subr.mxu0 0.0
    %581 = vmatpush2.msra.mxu0 0.0
    %582 = vmatprep.subr.mxu0 0.0
    %583 = vmatpush2.msra.mxu0 0.0
    %584 = vmatprep.subr.mxu0 0.0
    %585 = vmatpush2.msra.mxu0 0.0
    %586 = vmatprep.subr.mxu0 0.0
    %587 = vmatpush2.msra.mxu0 0.0
    %588 = vmatprep.subr.mxu0 0.0
    %589 = vmatpush2.msra.mxu0 0.0
    %590 = vmatprep.subr.mxu0 0.0
    %591 = vmatpush2.msra.mxu0 0.0
    %592 = vmatprep.subr.mxu0 0.0
    %593 = vmatpush2.msra.mxu0 0.0
    %594 = vmatprep.subr.mxu0 0.0
    %595 = vmatpush2.msra.mxu0 0.0
    %596 = vmatprep.subr.mxu0 0.0
    %597 = vmatpush2.msra.mxu0 0.0
    %598 = vmatprep.subr.mxu0 0.0
    %599 = vmatpush2.msra.mxu0 0.0
    %600 = vmatprep.subr.mxu0 0.0
    %601 = vmatpush2.msra.mxu0 0.0
    %602 = vmatprep.subr.mxu0 0.0
    %603 = vmatpush2.msra.mxu0 0.0
    %604 = vmatprep.subr.mxu0 0.0
    %605 = vmatpush2.msra.mxu0 0.0
    %606 = vmatprep.subr.mxu0 0.0
    %607 = vmatpush2.msra.mxu0 0.0
    %608 = vmatprep.subr.mxu0 0.0
    %609 = vmatpush2.msra.mxu0 0.0
    %610 = vmatprep.subr.mxu0 0.0
    %611 = vmatpush2.msra.mxu0 0.0
    %612 = vmatprep.mubr.f32.mxu0 0.0
    %613 = vmatmul.mubr.f32.gmra.mxu0 %v533
    %v614 = vpop.f32.mrf.mxu0
    %v615 = vadd.f32 %v529, %v614
    %v616 = vpop.f32.mrf.mxu0
    %617 = vmatprep.mubr.f32.mxu0 0.0
    %618 = vmatmul.mubr.f32.gmra.mxu0 %v536
    %v619 = vpop.f32.mrf.mxu0
    %v620 = vadd.f32 %v529, %v619
    %v621 = vpop.f32.mrf.mxu0
    %622 = vmatprep.mubr.f32.mxu0 0.0
    %623 = vmatmul.mubr.f32.gmra.mxu0 %v539
    %v624 = vpop.f32.mrf.mxu0
    %v625 = vadd.f32 %v529, %v624
    %v626 = vpop.f32.mrf.mxu0
    %627 = vmatprep.mubr.f32.mxu0 0.0
    %628 = vmatmul.mubr.f32.gmra.mxu0 %v542
    %v629 = vpop.f32.mrf.mxu0
    %v630 = vadd.f32 %v529, %v629
    %v631 = vpop.f32.mrf.mxu0
    %632 = vdwg.mxu0
    %vm633 = vcmask 16384
    %634 = vst.msk [vmem:[#allocation2] sm:$0x1] %vm633, %v516
    %635 = vst.msk [vmem:[#allocation4] sm:$0xff] %vm185, %v274
    %636 = vst.msk [vmem:[#allocation4 + $0x8] sm:$0xff] %vm185, %v275
    %639 = vst.msk [vmem:[#allocation6] sm:$0xff] %vm185, %v182
    %640 = vst.msk [vmem:[#allocation6 + $0x8] sm:$0xff] %vm185, %v184
    %641 = vst.msk [vmem:[#allocation7] sm:$0xff] %vm185, %v615
    %642 = vst.msk [vmem:[#allocation7 + $0x8] sm:$0xff] %vm185, %v620
    %643 = vst.msk [vmem:[#allocation7 + $0x10] sm:$0xff] %vm185, %v625
    %644 = vst.msk [vmem:[#allocation7 + $0x18] sm:$0xff] %vm185, %v630
    // Predicated region
    $region58: #{ggtnet_forward.1} parent=1 // pred_check
      _
    $region59: #{ggtnet_forward.1} parent=1 // pred_check_branch
      %646 = sbr.rel (0) target = $region61
    $region60: #{ggtnet_forward.1} parent=1 // pred_region
      %s648 = ssub.s32 16, 16
      %649 = vsyncadd [#allocation3], %s648
      %s651 = sshll.u32 [#allocation2], 4
      %s652 = int_to_ptr.vmem [resolvable:$true] %s651
      %654 = dma.vmem_to_hbm [thread:$0]  %s652, 16, %s14, [#allocation3]
    $region61: #{ggtnet_forward.1} parent=1 // pred_fallthru
      _
    // Predicated region
    $region62: #{ggtnet_forward.1} parent=1 // pred_check
      _
    $region63: #{ggtnet_forward.1} parent=1 // pred_check_branch
      %656 = sbr.rel (0) target = $region65
    $region64: #{ggtnet_forward.1} parent=1 // pred_region
      %s658 = ssub.s32 256, 256
      %659 = vsyncadd [#allocation5], %s658
      %s660 = sshll.u32 [#allocation4], 4
      %s661 = int_to_ptr.vmem [resolvable:$true] %s660
      %666 = dma.vmem_to_hbm [thread:$0]  %s661, 256, %s15, [#allocation5], 128, 128, 8
    $region65: #{ggtnet_forward.1} parent=1 // pred_fallthru
      _
    // Predicated region
    $region66: #{ggtnet_forward.1} parent=1 // pred_check
      _
    $region67: #{ggtnet_forward.1} parent=1 // pred_check_branch
      %668 = sbr.rel (0) target = $region69
    $region68: #{ggtnet_forward.1} parent=1 // pred_region
      %s670 = ssub.s32 256, 256
      %671 = vsyncadd [#allocation5], %s670
      %s672 = sshll.u32 [#allocation6], 4
      %s673 = int_to_ptr.vmem [resolvable:$true] %s672
      %678 = dma.vmem_to_hbm [thread:$0]  %s673, 256, %s16, [#allocation5], 128, 128, 8
    $region69: #{ggtnet_forward.1} parent=1 // pred_fallthru
      _
    // Predicated region
    $region70: #{ggtnet_forward.1} parent=1 // pred_check
      _
    $region71: #{ggtnet_forward.1} parent=1 // pred_check_branch
      %680 = sbr.rel (0) target = $region73
    $region72: #{ggtnet_forward.1} parent=1 // pred_region
      %s682 = ssub.s32 512, 512
      %683 = vsyncadd [#allocation8], %s682
      %s684 = sshll.u32 [#allocation7], 4
      %s685 = int_to_ptr.vmem [resolvable:$true] %s684
      %690 = dma.vmem_to_hbm [thread:$0]  %s685, 512, %s17, [#allocation8], 128, 128, 8
    $region73: #{ggtnet_forward.1} parent=1 // pred_fallthru
      _
    // Predicated region
    $region74: #{ggtnet_forward.1} parent=1 // pred_check
      _
    $region75: #{ggtnet_forward.1} parent=1 // pred_check_branch
      %692 = sbr.rel (0) target = $region77
    $region76: #{ggtnet_forward.1} parent=1 // pred_region
      %693 = dma.done [#allocation3], 16
    $region77: #{ggtnet_forward.1} parent=1 // pred_fallthru
      _
    // Predicated region
    $region78: #{ggtnet_forward.1} parent=1 // pred_check
      _
    $region79: #{ggtnet_forward.1} parent=1 // pred_check_branch
      %695 = sbr.rel (0) target = $region81
    $region80: #{ggtnet_forward.1} parent=1 // pred_region
      %696 = dma.done [#allocation5], 256
    $region81: #{ggtnet_forward.1} parent=1 // pred_fallthru
      _
    // Predicated region
    $region82: #{ggtnet_forward.1} parent=1 // pred_check
      _
    $region83: #{ggtnet_forward.1} parent=1 // pred_check_branch
      %698 = sbr.rel (0) target = $region85
    $region84: #{ggtnet_forward.1} parent=1 // pred_region
      %699 = dma.done [#allocation5], 256
    $region85: #{ggtnet_forward.1} parent=1 // pred_fallthru
      _
    // Predicated region
    $region86: #{ggtnet_forward.1} parent=1 // pred_check
      _
    $region87: #{ggtnet_forward.1} parent=1 // pred_check_branch
      %701 = sbr.rel (0) target = $region89
    $region88: #{ggtnet_forward.1} parent=1 // pred_region
      %702 = dma.done [#allocation8], 512
    $region89: #{ggtnet_forward.1} parent=1 // pred_fallthru
      _
    %703 = vsyncpa [#allocation3], 1
    %704 = vsyncpa [#allocation5], 1
    %705 = vsyncpa [#allocation8], 1

</llo_original>
